<compile_context>
chip_gen: v5e
topology: v5e:2x2
jax: 0.10.0
libtpu: 0.0.40
codegen_flags: <defaults>
</compile_context>

<pallas_src>
import functools
from typing import NamedTuple

import jax
import jax.numpy as jnp
from jax.experimental import pallas as pl
from jax.experimental.pallas import tpu as pltpu

_LANE = 128
_SUBLANE_BF16 = 16          # bf16 packs two rows per sublane -> tile rows % 16
_DEFAULT_TILE_B = 512


def _round_up(x, m):
    return ((x + m - 1) // m) * m


def _vmem_capacity_bytes():
    """Generation-aware VMEM capacity with a conservative fallback."""
    try:
        return int(pltpu.get_tpu_info().vmem_capacity_bytes)
    except Exception:
        return 64 << 20     # safe on v5e/v6e (128 MiB) and v7x (64 MiB)


def _pick_tile_k(tb, d_in_p, d_hid_p, d_out_p, x_itemsize, budget_bytes):
    """Largest lane-aligned divisor of d_in_p whose working set fits `budget_bytes`.

    Working set per grid step (default double-buffering on streamed operands):
      x tile (2 bufs), w1 tile (2 bufs, bf16), resident b1/w2/b2, out tile
      (2 bufs, f32) and the f32 hidden accumulator scratch.
    """
    fixed = (
        2 * (d_hid_p + d_out_p) * 4      # b1, b2 (f32)
        + 2 * d_hid_p * d_out_p * 2      # w2 (bf16)
        + 2 * tb * d_out_p * 4           # output tile (f32)
        + tb * d_hid_p * 4               # hidden accumulator scratch (f32)
    )
    m = d_in_p // _LANE
    tk = _LANE
    for div in range(1, m + 1):
        if m % div:
            continue
        cand = div * _LANE
        use = fixed + 2 * tb * cand * x_itemsize + 2 * cand * d_hid_p * 2
        if use <= budget_bytes:
            tk = cand
    return tk


class GateParams(NamedTuple):
    w1: jax.Array        # (d_in_p, d_hid_p)  bf16, zero-padded
    b1: jax.Array        # (1, d_hid_p)       f32,  zero-padded
    w2: jax.Array        # (d_hid_p, d_out_p) bf16, zero-padded
    b2: jax.Array        # (1, d_out_p)       f32,  zero-padded
    dim_in: int
    dim_out: int


def prepare_gate_params(w1, b1, w2, b2):
    """One-time pad + bf16 cast of the Gate weights (call once, reuse per forward)."""
    dim_in, dim_hidden = w1.shape
    dim_out = w2.shape[1]
    d_in_p = _round_up(dim_in, _LANE)
    d_hid_p = _round_up(dim_hidden, _LANE)     # 200 -> 256
    d_out_p = _round_up(dim_out, _LANE)        # 10  -> 128

    bf16, f32 = jnp.bfloat16, jnp.float32
    w1_p = jnp.zeros((d_in_p, d_hid_p), bf16).at[:dim_in, :dim_hidden].set(
        w1.astype(bf16))
    b1_p = jnp.zeros((1, d_hid_p), f32).at[0, :dim_hidden].set(b1.astype(f32))
    w2_p = jnp.zeros((d_hid_p, d_out_p), bf16).at[:dim_hidden, :dim_out].set(
        w2.astype(bf16))
    b2_p = jnp.zeros((1, d_out_p), f32).at[0, :dim_out].set(b2.astype(f32))
    return GateParams(w1_p, b1_p, w2_p, b2_p, dim_in, dim_out)


def gate_kernel(x_ref, w1_ref, b1_ref, w2_ref, b2_ref, o_ref, h_acc):
    k = pl.program_id(1)

    @pl.when(k == 0)
    def _():
        h_acc[...] = jnp.zeros_like(h_acc)

    # First matmul on the MXU: bf16 operands (x cast on-chip), f32 accumulation.
    h_acc[...] += jnp.dot(x_ref[...].astype(jnp.bfloat16), w1_ref[...],
                          preferred_element_type=jnp.float32)

    @pl.when(k == pl.num_programs(1) - 1)
    def _():
        # Bias + ReLU in f32 on the VPU (dropout == identity in eval mode).
        h = jnp.maximum(h_acc[...] + b1_ref[...], 0.0)
        # Second matmul: cast activations back to bf16 for the MXU, f32 acc.
        y = jnp.dot(h.astype(w2_ref.dtype), w2_ref[...],
                    preferred_element_type=jnp.float32)
        o_ref[...] = (y + b2_ref[...]).astype(o_ref.dtype)


def gate_forward(x_nchw, params: GateParams, *, tile_b=_DEFAULT_TILE_B):
    """x_nchw: (B, C, H, W).  Returns (B, dim_out) float32 == Gate.forward (eval)."""
    B = x_nchw.shape[0]
    dim_in = x_nchw.shape[1] * x_nchw.shape[-2] * x_nchw.shape[-1]
    assert dim_in == params.dim_in, "input feature size mismatch"
    x2d = x_nchw.reshape(B, dim_in)            # glue: same as torch .view

    d_in_p, d_hid_p = params.w1.shape
    d_out_p = params.w2.shape[1]
    f32 = jnp.float32

    # Batch tile: multiple of 16 (bf16 sublane packing), at most tile_b.
    tb = min(tile_b, _round_up(max(B, 1), _SUBLANE_BF16))
    b_p = _round_up(B, tb)

    # Zero-copy path when no padding is required: pass x straight through and
    # cast f32->bf16 inside the kernel (no separate pad/cast HBM round trip).
    if B == b_p and dim_in == d_in_p:
        x_in = x2d
    else:
        x_in = jnp.zeros((b_p, d_in_p), jnp.bfloat16).at[:B, :dim_in].set(
            x2d.astype(jnp.bfloat16))

    vmem_cap = _vmem_capacity_bytes()
    tk = _pick_tile_k(tb, d_in_p, d_hid_p, d_out_p,
                      jnp.dtype(x_in.dtype).itemsize, int(vmem_cap * 0.55))
    num_k = d_in_p // tk

    # Megacore note: with >=2 steps on the batch axis ("parallel") v7x shards it
    # across both TensorCores; each core holds its own copy of the resident
    # weights, which the tk budget above already accounts for.
    grid = (b_p // tb, num_k)

    out_p = pl.pallas_call(
        gate_kernel,
        out_shape=jax.ShapeDtypeStruct((b_p, d_out_p), f32),
        grid_spec=pltpu.PrefetchScalarGridSpec(
            num_scalar_prefetch=0,
            grid=grid,
            in_specs=[
                pl.BlockSpec((tb, tk), lambda i, k: (i, k)),        # x tile
                pl.BlockSpec((tk, d_hid_p), lambda i, k: (k, 0)),   # w1 (K-streamed)
                pl.BlockSpec((1, d_hid_p), lambda i, k: (0, 0)),    # b1 (resident)
                pl.BlockSpec((d_hid_p, d_out_p), lambda i, k: (0, 0)),  # w2 (resident)
                pl.BlockSpec((1, d_out_p), lambda i, k: (0, 0)),    # b2 (resident)
            ],
            out_specs=pl.BlockSpec((tb, d_out_p), lambda i, k: (i, 0)),
            scratch_shapes=[pltpu.VMEM((tb, d_hid_p), f32)],        # hidden acc
        ),
        compiler_params=pltpu.CompilerParams(
            dimension_semantics=("parallel", "arbitrary"),
            vmem_limit_bytes=int(vmem_cap * 0.72),
        ),
    )(x_in, params.w1, params.b1, params.w2, params.b2)

    return out_p[:B, :params.dim_out]


def init_gate_params(key, dim_in, dim_out, dim_hidden=200, dtype=jnp.float32):
    """Deterministic init mimicking nn.Linear's U(-1/sqrt(fan_in), 1/sqrt(fan_in))."""
    k1, k2, k3, k4 = jax.random.split(key, 4)
    bound1 = 1.0 / jnp.sqrt(jnp.array(dim_in, dtype))
    bound2 = 1.0 / jnp.sqrt(jnp.array(dim_hidden, dtype))
    # stored as (in, out) == transpose of torch's (out, in)
    w1 = jax.random.uniform(k1, (dim_in, dim_hidden), dtype, -bound1, bound1)
    b1 = jax.random.uniform(k2, (dim_hidden,), dtype, -bound1, bound1)
    w2 = jax.random.uniform(k3, (dim_hidden, dim_out), dtype, -bound2, bound2)
    b2 = jax.random.uniform(k4, (dim_out,), dtype, -bound2, bound2)
    return w1, b1, w2, b2


if __name__ == "__main__":
    key = jax.random.PRNGKey(0)
    kx, kp = jax.random.split(key)

    # Small shapes consistent with the module: NCHW input, flattened to C*H*W.
    B, C, H, W = 2, 4, 16, 16
    dim_in = C * H * W            # 1024
    dim_out = 10

    x = jax.random.normal(kx, (B, C, H, W), jnp.float32)
    w1, b1, w2, b2 = init_gate_params(kp, dim_in, dim_out)
    params = prepare_gate_params(w1, b1, w2, b2)   # one-time weight pad/cast

    out = gate_forward(x, params)
    out = jax.block_until_ready(out)
    assert out.shape == (B, dim_out)

    # Reference 1: same bf16-operand / f32-accumulate recipe in plain JAX.
    x2d = x.reshape(B, dim_in)
    h_ref = jnp.maximum(
        jnp.dot(x2d.astype(jnp.bfloat16), w1.astype(jnp.bfloat16),
                preferred_element_type=jnp.float32) + b1, 0.0)
    ref_bf16 = jnp.dot(h_ref.astype(jnp.bfloat16), w2.astype(jnp.bfloat16),
                       preferred_element_type=jnp.float32) + b2
    assert jnp.allclose(out, ref_bf16, atol=1e-2, rtol=1e-2), \
        "mismatch vs bf16 reference"

    # Reference 2: full-f32 reference (loose tolerance for bf16 weight cast).
    ref_f32 = jnp.maximum(x2d @ w1 + b1, 0.0) @ w2 + b2
    assert jnp.allclose(out, ref_f32, atol=5e-2, rtol=5e-2), \
        "mismatch vs f32 reference"

    # Also exercise the zero-copy (tile-aligned, no-pad) input path.
    B2 = 16
    x_big = jax.random.normal(jax.random.PRNGKey(1), (B2, C, H, W), jnp.float32)
    out_big = jax.block_until_ready(gate_forward(x_big, params))
    ref_big = jnp.maximum(x_big.reshape(B2, dim_in) @ w1 + b1, 0.0) @ w2 + b2
    assert out_big.shape == (B2, dim_out)
    assert jnp.allclose(out_big, ref_big, atol=5e-2, rtol=5e-2), \
        "mismatch vs f32 reference (aligned-batch path)"

    print("KERNEL_OK")
</pallas_src>

<mosaic_0001>
module attributes {stable_mosaic.version = 11 : i64} {
  func.func @gate_kernel(%arg0: i32, %arg1: i32, %arg2: memref<16x1024xbf16, #tpu.memory_space<vmem>>, %arg3: memref<1024x256xbf16, #tpu.memory_space<vmem>>, %arg4: memref<1x256xf32, #tpu.memory_space<vmem>>, %arg5: memref<256x128xbf16, #tpu.memory_space<vmem>>, %arg6: memref<1x128xf32, #tpu.memory_space<vmem>>, %arg7: memref<16x128xf32, #tpu.memory_space<vmem>>, %arg8: memref<16x256xf32, #tpu.memory_space<vmem>>) attributes {dimension_semantics = [#tpu.dimension_semantics<parallel>, #tpu.dimension_semantics<arbitrary>], iteration_bounds = array<i64: 1, 1>, scalar_prefetch = 0 : i64, scratch_operands = 1 : i64, tpu.core_type = #tpu.core_type<tc>, window_params = [{transform_indices = @transform_0, window_bounds = array<i64: 16, 1024>}, {transform_indices = @transform_1, window_bounds = array<i64: 1024, 256>}, {pipeline_mode = #tpu.pipeline_mode<synchronous>, transform_indices = @transform_2, window_bounds = array<i64: 1, 256>}, {pipeline_mode = #tpu.pipeline_mode<synchronous>, transform_indices = @transform_3, window_bounds = array<i64: 256, 128>}, {pipeline_mode = #tpu.pipeline_mode<synchronous>, transform_indices = @transform_4, window_bounds = array<i64: 1, 128>}, {transform_indices = @transform_5, window_bounds = array<i64: 16, 128>}]} {
    %c0_i32 = arith.constant 0 : i32
    %0 = arith.cmpi eq, %arg1, %c0_i32 : i32
    %1 = arith.extui %0 : i1 to i32
    %c0_i32_0 = arith.constant 0 : i32
    %2 = arith.cmpi ne, %1, %c0_i32_0 : i32
    scf.if %2 {
      %cst_10 = arith.constant 0.000000e+00 : f32
      %12 = vector.broadcast %cst_10 : f32 to vector<16x256xf32>
      %c0_11 = arith.constant 0 : index
      %c0_12 = arith.constant 0 : index
      %13 = vector.load %arg8[%c0_11, %c0_12] : memref<16x256xf32, #tpu.memory_space<vmem>>, vector<16x256xf32>
      tpu.vector_store %arg8[%c0_11, %c0_12], %12 {strides = array<i32>} : memref<16x256xf32, #tpu.memory_space<vmem>>, vector<16x256xf32>,
    } else {
    }
    %c0 = arith.constant 0 : index
    %c0_1 = arith.constant 0 : index
    %3 = vector.load %arg8[%c0, %c0_1] : memref<16x256xf32, #tpu.memory_space<vmem>>, vector<16x256xf32>
    %c0_2 = arith.constant 0 : index
    %c0_3 = arith.constant 0 : index
    %4 = vector.load %arg2[%c0_2, %c0_3] : memref<16x1024xbf16, #tpu.memory_space<vmem>>, vector<16x1024xbf16>
    %c0_4 = arith.constant 0 : index
    %c0_5 = arith.constant 0 : index
    %5 = vector.load %arg3[%c0_4, %c0_5] : memref<1024x256xbf16, #tpu.memory_space<vmem>>, vector<1024x256xbf16>
    %cst = arith.constant dense<0.000000e+00> : vector<16x256xf32>
    %6 = tpu.matmul %4, %5, %cst {dimension_numbers = #tpu.dot_dimension_numbers<[1], [0], [0], [1], [0, 0, 1, 1], [], []>} : vector<16x1024xbf16>, vector<1024x256xbf16>, vector<16x256xf32> -> vector<16x256xf32>
    %7 = arith.addf %3, %6 : vector<16x256xf32>
    %c0_6 = arith.constant 0 : index
    %c0_7 = arith.constant 0 : index
    %8 = vector.load %arg8[%c0_6, %c0_7] : memref<16x256xf32, #tpu.memory_space<vmem>>, vector<16x256xf32>
    tpu.vector_store %arg8[%c0_6, %c0_7], %7 {strides = array<i32>} : memref<16x256xf32, #tpu.memory_space<vmem>>, vector<16x256xf32>,
    %c0_i32_8 = arith.constant 0 : i32
    %9 = arith.cmpi eq, %arg1, %c0_i32_8 : i32
    %10 = arith.extui %9 : i1 to i32
    %c0_i32_9 = arith.constant 0 : i32
    %11 = arith.cmpi ne, %10, %c0_i32_9 : i32
    scf.if %11 {
      %c0_10 = arith.constant 0 : index
      %c0_11 = arith.constant 0 : index
      %12 = vector.load %arg8[%c0_10, %c0_11] : memref<16x256xf32, #tpu.memory_space<vmem>>, vector<16x256xf32>
      %c0_12 = arith.constant 0 : index
      %c0_13 = arith.constant 0 : index
      %13 = vector.load %arg4[%c0_12, %c0_13] : memref<1x256xf32, #tpu.memory_space<vmem>>, vector<1x256xf32>
      %14 = vector.broadcast %13 : vector<1x256xf32> to vector<16x256xf32>
      %15 = arith.addf %12, %14 : vector<16x256xf32>
      %cst_14 = arith.constant 0.000000e+00 : f32
      %16 = vector.broadcast %cst_14 : f32 to vector<16x256xf32>
      %17 = arith.maximumf %15, %16 : vector<16x256xf32>
      %18 = arith.truncf %17 : vector<16x256xf32> to vector<16x256xbf16>
      %c0_15 = arith.constant 0 : index
      %c0_16 = arith.constant 0 : index
      %19 = vector.load %arg5[%c0_15, %c0_16] : memref<256x128xbf16, #tpu.memory_space<vmem>>, vector<256x128xbf16>
      %cst_17 = arith.constant dense<0.000000e+00> : vector<16x128xf32>
      %20 = tpu.matmul %18, %19, %cst_17 {dimension_numbers = #tpu.dot_dimension_numbers<[1], [0], [0], [1], [0, 0, 1, 1], [], []>} : vector<16x256xbf16>, vector<256x128xbf16>, vector<16x128xf32> -> vector<16x128xf32>
      %c0_18 = arith.constant 0 : index
      %c0_19 = arith.constant 0 : index
      %21 = vector.load %arg6[%c0_18, %c0_19] : memref<1x128xf32, #tpu.memory_space<vmem>>, vector<1x128xf32>
      %22 = vector.broadcast %21 : vector<1x128xf32> to vector<16x128xf32>
      %23 = arith.addf %20, %22 : vector<16x128xf32>
      %c0_20 = arith.constant 0 : index
      %c0_21 = arith.constant 0 : index
      %24 = vector.load %arg7[%c0_20, %c0_21] : memref<16x128xf32, #tpu.memory_space<vmem>>, vector<16x128xf32>
      tpu.vector_store %arg7[%c0_20, %c0_21], %23 {strides = array<i32>} : memref<16x128xf32, #tpu.memory_space<vmem>>, vector<16x128xf32>,
    } else {
    }
    return
  }
  func.func @transform_0(%arg0: i32, %arg1: i32) -> (i32, i32) {
    %c0_i32 = arith.constant 0 : i32
    return %arg0, %arg1 : i32, i32
  }
  func.func @transform_1(%arg0: i32, %arg1: i32) -> (i32, i32) {
    %c0_i32 = arith.constant 0 : i32
    %c0_i32_0 = arith.constant 0 : i32
    return %arg1, %c0_i32 : i32, i32
  }
  func.func @transform_2(%arg0: i32, %arg1: i32) -> (i32, i32) {
    %c0_i32 = arith.constant 0 : i32
    %c0_i32_0 = arith.constant 0 : i32
    %c0_i32_1 = arith.constant 0 : i32
    return %c0_i32, %c0_i32_0 : i32, i32
  }
  func.func @transform_3(%arg0: i32, %arg1: i32) -> (i32, i32) {
    %c0_i32 = arith.constant 0 : i32
    %c0_i32_0 = arith.constant 0 : i32
    %c0_i32_1 = arith.constant 0 : i32
    return %c0_i32, %c0_i32_0 : i32, i32
  }
  func.func @transform_4(%arg0: i32, %arg1: i32) -> (i32, i32) {
    %c0_i32 = arith.constant 0 : i32
    %c0_i32_0 = arith.constant 0 : i32
    %c0_i32_1 = arith.constant 0 : i32
    return %c0_i32, %c0_i32_0 : i32, i32
  }
  func.func @transform_5(%arg0: i32, %arg1: i32) -> (i32, i32) {
    %c0_i32 = arith.constant 0 : i32
    %c0_i32_0 = arith.constant 0 : i32
    return %arg0, %c0_i32 : i32, i32
  }
}

</mosaic_0001>

<llo_original>
// kernel: tpu_custom_call.1
$region0: #{tpu_custom_call.1}
  #allocation0 [shape = 'u32[]', space=smem, size = 0x4, offset = 0x4, fixed_abs, tag = 'smem constant byte address 0x4 - core index']
  #allocation1 [shape = 'u32[72,128]{1,0:T(1,128)}', space=vmem, size = 0x9000, scoped, tag = 'internal scratch']
  #allocation2 [shape = 'f32[16,256]{1,0:T(8,128)}', space=vmem, size = 0x4000, scoped, tag = 'scratch operand']
  %s0 = inlined_call_operand.hbm [shape: bf16[16,1024], index: 0, kind: input, shape index: {}]
  %s1 = inlined_call_operand.hbm [shape: bf16[1024,256], index: 1, kind: input, shape index: {}]
  %s2 = inlined_call_operand.hbm [shape: f32[1,256], index: 2, kind: input, shape index: {}]
  %s3 = inlined_call_operand.hbm [shape: bf16[256,128], index: 3, kind: input, shape index: {}]
  %s4 = inlined_call_operand.vmem [shape: f32[1,128], index: 4, kind: input, shape index: {}]
  %s5 = inlined_call_operand.hbm [shape: f32[16,128], index: 5, kind: output, shape index: {}]
  %s6 = sld [smem:[#allocation0]]
  $region54: #{tpu_custom_call.1} parent=0
    _
  %s8 = ssub.s32 1, %s6
  %s9 = scalar_select 0, %s8, %s6
  $region1: #{tpu_custom_call.1} parent=0
    #allocation3 [shape = 'u8[32768]{0}', space=vmem, size = 0x8000, scoped, tag = 'input window, operand 0, single buffered']
    #allocation4 [shape = 's32[1]{0}', space=sflag, size = 0x4, scoped, tag = 'scoped memory for tpu_custom_call.1']
    #allocation5 [shape = 's32[1]{0}', space=sflag, size = 0x4, scoped, tag = 'scoped memory for tpu_custom_call.1']
    #allocation6 [shape = 'u8[524288]{0}', space=vmem, size = 0x80000, scoped, tag = 'input window, operand 1, single buffered']
    #allocation7 [shape = 's32[1]{0}', space=sflag, size = 0x4, scoped, tag = 'scoped memory for tpu_custom_call.1']
    #allocation8 [shape = 'u8[1024]{0}', space=vmem, size = 0x400, scoped, tag = 'input window, operand 2, single buffered']
    #allocation9 [shape = 'u8[65536]{0}', space=vmem, size = 0x10000, scoped, tag = 'input window, operand 3, single buffered']
    #allocation10 [shape = 's32[1]{0}', space=sflag, size = 0x4, scoped, tag = 'scoped memory for tpu_custom_call.1']
    #allocation11 [shape = 'u8[8192]{0}', space=vmem, size = 0x2000, scoped, tag = 'output window, operand 0, single buffered']
    %10 = vsyncpa [#allocation4], 0
    %11 = vsyncpa [#allocation7], 0
    %12 = vsyncpa [#allocation10], 0
    %13 = vsyncpa [#allocation5], 0
    // Predicated region
    $region2: #{tpu_custom_call.1} parent=1 // pred_check
      _
    $region3: #{tpu_custom_call.1} parent=1 // pred_check_branch
      %15 = sbr.rel (0) target = $region5
    $region4: #{tpu_custom_call.1} parent=1 // pred_region
      %17 = vsyncadd [#allocation4], 0
      %s18 = sshll.u32 %s0, 4
      %s19 = int_to_ptr.hbm [resolvable:$true] %s18
      %s20 = sshll.u32 [#allocation3], 4
      %s21 = int_to_ptr.vmem [resolvable:$true] %s20
      %26 = dma.hbm_to_vmem [thread:$0]  %s19, 1024, %s21, [#allocation4], 512, 512, 32
    $region5: #{tpu_custom_call.1} parent=1 // pred_fallthru
      _
    // Predicated region
    $region6: #{tpu_custom_call.1} parent=1 // pred_check
      _
    $region7: #{tpu_custom_call.1} parent=1 // pred_check_branch
      %28 = sbr.rel (0) target = $region9
    $region8: #{tpu_custom_call.1} parent=1 // pred_region
      %30 = vsyncadd [#allocation7], 0
      %s31 = sshll.u32 %s1, 4
      %s32 = int_to_ptr.hbm [resolvable:$true] %s31
      %s33 = sshll.u32 [#allocation6], 4
      %s34 = int_to_ptr.vmem [resolvable:$true] %s33
      %39 = dma.hbm_to_vmem [thread:$0]  %s32, 16384, %s34, [#allocation7], 128, 128, 8
    $region9: #{tpu_custom_call.1} parent=1 // pred_fallthru
      _
    // Predicated region
    $region10: #{tpu_custom_call.1} parent=1 // pred_check
      _
    $region11: #{tpu_custom_call.1} parent=1 // pred_check_branch
      %41 = sbr.rel (0) target = $region13
    $region12: #{tpu_custom_call.1} parent=1 // pred_region
      %43 = vsyncadd [#allocation7], 0
      %s45 = sshll.u32 %s2, 4
      %s46 = int_to_ptr.hbm [resolvable:$true] %s45
      %s47 = sshll.u32 [#allocation8], 4
      %s48 = int_to_ptr.vmem [resolvable:$true] %s47
      %50 = dma.hbm_to_vmem [thread:$0]  %s46, 32, %s48, [#allocation7]
    $region13: #{tpu_custom_call.1} parent=1 // pred_fallthru
      _
    // Predicated region
    $region14: #{tpu_custom_call.1} parent=1 // pred_check
      _
    $region15: #{tpu_custom_call.1} parent=1 // pred_check_branch
      %52 = sbr.rel (0) target = $region17
    $region16: #{tpu_custom_call.1} parent=1 // pred_region
      %54 = vsyncadd [#allocation10], 0
      %s55 = sshll.u32 %s3, 4
      %s56 = int_to_ptr.hbm [resolvable:$true] %s55
      %s57 = sshll.u32 [#allocation9], 4
      %s58 = int_to_ptr.vmem [resolvable:$true] %s57
      %63 = dma.hbm_to_vmem [thread:$0]  %s56, 2048, %s58, [#allocation10], 64, 64, 4
    $region17: #{tpu_custom_call.1} parent=1 // pred_fallthru
      _
    // Predicated region
    $region18: #{tpu_custom_call.1} parent=1 // pred_check
      _
    $region19: #{tpu_custom_call.1} parent=1 // pred_check_branch
      %65 = sbr.rel (0) target = $region21
    $region20: #{tpu_custom_call.1} parent=1 // pred_region
      _
    $region21: #{tpu_custom_call.1} parent=1 // pred_fallthru
      _
    // Predicated region
    $region22: #{tpu_custom_call.1} parent=1 // pred_check
      _
    $region23: #{tpu_custom_call.1} parent=1 // pred_check_branch
      %67 = sbr.rel (0) target = $region25
    $region24: #{tpu_custom_call.1} parent=1 // pred_region
      %69 = dma.done [#allocation4], 1024
    $region25: #{tpu_custom_call.1} parent=1 // pred_fallthru
      _
    // Predicated region
    $region26: #{tpu_custom_call.1} parent=1 // pred_check
      _
    $region27: #{tpu_custom_call.1} parent=1 // pred_check_branch
      %71 = sbr.rel (0) target = $region29
    $region28: #{tpu_custom_call.1} parent=1 // pred_region
      %73 = dma.done [#allocation7], 16384
    $region29: #{tpu_custom_call.1} parent=1 // pred_fallthru
      _
    // Predicated region
    $region30: #{tpu_custom_call.1} parent=1 // pred_check
      _
    $region31: #{tpu_custom_call.1} parent=1 // pred_check_branch
      %75 = sbr.rel (0) target = $region33
    $region32: #{tpu_custom_call.1} parent=1 // pred_region
      %77 = dma.done [#allocation7], 32
    $region33: #{tpu_custom_call.1} parent=1 // pred_fallthru
      _
    // Predicated region
    $region34: #{tpu_custom_call.1} parent=1 // pred_check
      _
    $region35: #{tpu_custom_call.1} parent=1 // pred_check_branch
      %79 = sbr.rel (0) target = $region37
    $region36: #{tpu_custom_call.1} parent=1 // pred_region
      %81 = dma.done [#allocation10], 2048
    $region37: #{tpu_custom_call.1} parent=1 // pred_fallthru
      _
    %p82 = scmp.eq.s32.totalorder 0, 0
    // Predicated region
    $region38: #{tpu_custom_call.1} parent=1 // pred_check
      %p83 = pneg %p82
    $region39: #{tpu_custom_call.1} parent=1 // pred_check_branch
      %85 = sbr.rel (%p83) target = $region41
    $region40: #{tpu_custom_call.1} parent=1 // pred_region
      %86 = vst [vmem:[#allocation2] sm:$0xff] 0.0
      %87 = vst [vmem:[#allocation2 + $0x8] sm:$0xff] 0.0
      %88 = vst [vmem:[#allocation2 + $0x10] sm:$0xff] 0.0
      %89 = vst [vmem:[#allocation2 + $0x18] sm:$0xff] 0.0
    $region41: #{tpu_custom_call.1} parent=1 // pred_fallthru
      _
    %v90 = vld [vmem:[#allocation2] sm:$0xff]
    %v91 = vld [vmem:[#allocation2 + $0x8] sm:$0xff]
    %v92 = vld [vmem:[#allocation2 + $0x10] sm:$0xff]
    %v93 = vld [vmem:[#allocation2 + $0x18] sm:$0xff]
    %v94 = vld [vmem:[#allocation3] sm:$0xff]
    %v95 = vld [vmem:[#allocation3 + $0x8] sm:$0xff]
    %v96 = vld [vmem:[#allocation3 + $0x10] sm:$0xff]
    %v97 = vld [vmem:[#allocation3 + $0x18] sm:$0xff]
    %v98 = vld [vmem:[#allocation3 + $0x20] sm:$0xff]
    %v99 = vld [vmem:[#allocation3 + $0x28] sm:$0xff]
    %v100 = vld [vmem:[#allocation3 + $0x30] sm:$0xff]
    %v101 = vld [vmem:[#allocation3 + $0x38] sm:$0xff]
    %v102 = vld [vmem:[#allocation6] sm:$0xff]
    %v103 = vld [vmem:[#allocation6 + $0x8] sm:$0xff]
    %v104 = vld [vmem:[#allocation6 + $0x10] sm:$0xff]
    %v105 = vld [vmem:[#allocation6 + $0x18] sm:$0xff]
    %v106 = vld [vmem:[#allocation6 + $0x20] sm:$0xff]
    %v107 = vld [vmem:[#allocation6 + $0x28] sm:$0xff]
    %v108 = vld [vmem:[#allocation6 + $0x30] sm:$0xff]
    %v109 = vld [vmem:[#allocation6 + $0x38] sm:$0xff]
    %v110 = vld [vmem:[#allocation6 + $0x40] sm:$0xff]
    %v111 = vld [vmem:[#allocation6 + $0x48] sm:$0xff]
    %v112 = vld [vmem:[#allocation6 + $0x50] sm:$0xff]
    %v113 = vld [vmem:[#allocation6 + $0x58] sm:$0xff]
    %v114 = vld [vmem:[#allocation6 + $0x60] sm:$0xff]
    %v115 = vld [vmem:[#allocation6 + $0x68] sm:$0xff]
    %v116 = vld [vmem:[#allocation6 + $0x70] sm:$0xff]
    %v117 = vld [vmem:[#allocation6 + $0x78] sm:$0xff]
    %v118 = vld [vmem:[#allocation6 + $0x80] sm:$0xff]
    %v119 = vld [vmem:[#allocation6 + $0x88] sm:$0xff]
    %v120 = vld [vmem:[#allocation6 + $0x90] sm:$0xff]
    %v121 = vld [vmem:[#allocation6 + $0x98] sm:$0xff]
    %v122 = vld [vmem:[#allocation6 + $0xa0] sm:$0xff]
    %v123 = vld [vmem:[#allocation6 + $0xa8] sm:$0xff]
    %v124 = vld [vmem:[#allocation6 + $0xb0] sm:$0xff]
    %v125 = vld [vmem:[#allocation6 + $0xb8] sm:$0xff]
    %v126 = vld [vmem:[#allocation6 + $0xc0] sm:$0xff]
    %v127 = vld [vmem:[#allocation6 + $0xc8] sm:$0xff]
    %v128 = vld [vmem:[#allocation6 + $0xd0] sm:$0xff]
    %v129 = vld [vmem:[#allocation6 + $0xd8] sm:$0xff]
    %v130 = vld [vmem:[#allocation6 + $0xe0] sm:$0xff]
    %v131 = vld [vmem:[#allocation6 + $0xe8] sm:$0xff]
    %v132 = vld [vmem:[#allocation6 + $0xf0] sm:$0xff]
    %v133 = vld [vmem:[#allocation6 + $0xf8] sm:$0xff]
    %v134 = vld [vmem:[#allocation6 + $0x100] sm:$0xff]
    %v135 = vld [vmem:[#allocation6 + $0x108] sm:$0xff]
    %v136 = vld [vmem:[#allocation6 + $0x110] sm:$0xff]
    %v137 = vld [vmem:[#allocation6 + $0x118] sm:$0xff]
    %v138 = vld [vmem:[#allocation6 + $0x120] sm:$0xff]
    %v139 = vld [vmem:[#allocation6 + $0x128] sm:$0xff]
    %v140 = vld [vmem:[#allocation6 + $0x130] sm:$0xff]
    %v141 = vld [vmem:[#allocation6 + $0x138] sm:$0xff]
    %v142 = vld [vmem:[#allocation6 + $0x140] sm:$0xff]
    %v143 = vld [vmem:[#allocation6 + $0x148] sm:$0xff]
    %v144 = vld [vmem:[#allocation6 + $0x150] sm:$0xff]
    %v145 = vld [vmem:[#allocation6 + $0x158] sm:$0xff]
    %v146 = vld [vmem:[#allocation6 + $0x160] sm:$0xff]
    %v147 = vld [vmem:[#allocation6 + $0x168] sm:$0xff]
    %v148 = vld [vmem:[#allocation6 + $0x170] sm:$0xff]
    %v149 = vld [vmem:[#allocation6 + $0x178] sm:$0xff]
    %v150 = vld [vmem:[#allocation6 + $0x180] sm:$0xff]
    %v151 = vld [vmem:[#allocation6 + $0x188] sm:$0xff]
    %v152 = vld [vmem:[#allocation6 + $0x190] sm:$0xff]
    %v153 = vld [vmem:[#allocation6 + $0x198] sm:$0xff]
    %v154 = vld [vmem:[#allocation6 + $0x1a0] sm:$0xff]
    %v155 = vld [vmem:[#allocation6 + $0x1a8] sm:$0xff]
    %v156 = vld [vmem:[#allocation6 + $0x1b0] sm:$0xff]
    %v157 = vld [vmem:[#allocation6 + $0x1b8] sm:$0xff]
    %v158 = vld [vmem:[#allocation6 + $0x1c0] sm:$0xff]
    %v159 = vld [vmem:[#allocation6 + $0x1c8] sm:$0xff]
    %v160 = vld [vmem:[#allocation6 + $0x1d0] sm:$0xff]
    %v161 = vld [vmem:[#allocation6 + $0x1d8] sm:$0xff]
    %v162 = vld [vmem:[#allocation6 + $0x1e0] sm:$0xff]
    %v163 = vld [vmem:[#allocation6 + $0x1e8] sm:$0xff]
    %v164 = vld [vmem:[#allocation6 + $0x1f0] sm:$0xff]
    %v165 = vld [vmem:[#allocation6 + $0x1f8] sm:$0xff]
    %v166 = vld [vmem:[#allocation6 + $0x200] sm:$0xff]
    %v167 = vld [vmem:[#allocation6 + $0x208] sm:$0xff]
    %v168 = vld [vmem:[#allocation6 + $0x210] sm:$0xff]
    %v169 = vld [vmem:[#allocation6 + $0x218] sm:$0xff]
    %v170 = vld [vmem:[#allocation6 + $0x220] sm:$0xff]
    %v171 = vld [vmem:[#allocation6 + $0x228] sm:$0xff]
    %v172 = vld [vmem:[#allocation6 + $0x230] sm:$0xff]
    %v173 = vld [vmem:[#allocation6 + $0x238] sm:$0xff]
    %v174 = vld [vmem:[#allocation6 + $0x240] sm:$0xff]
    %v175 = vld [vmem:[#allocation6 + $0x248] sm:$0xff]
    %v176 = vld [vmem:[#allocation6 + $0x250] sm:$0xff]
    %v177 = vld [vmem:[#allocation6 + $0x258] sm:$0xff]
    %v178 = vld [vmem:[#allocation6 + $0x260] sm:$0xff]
    %v179 = vld [vmem:[#allocation6 + $0x268] sm:$0xff]
    %v180 = vld [vmem:[#allocation6 + $0x270] sm:$0xff]
    %v181 = vld [vmem:[#allocation6 + $0x278] sm:$0xff]
    %v182 = vld [vmem:[#allocation6 + $0x280] sm:$0xff]
    %v183 = vld [vmem:[#allocation6 + $0x288] sm:$0xff]
    %v184 = vld [vmem:[#allocation6 + $0x290] sm:$0xff]
    %v185 = vld [vmem:[#allocation6 + $0x298] sm:$0xff]
    %v186 = vld [vmem:[#allocation6 + $0x2a0] sm:$0xff]
    %v187 = vld [vmem:[#allocation6 + $0x2a8] sm:$0xff]
    %v188 = vld [vmem:[#allocation6 + $0x2b0] sm:$0xff]
    %v189 = vld [vmem:[#allocation6 + $0x2b8] sm:$0xff]
    %v190 = vld [vmem:[#allocation6 + $0x2c0] sm:$0xff]
    %v191 = vld [vmem:[#allocation6 + $0x2c8] sm:$0xff]
    %v192 = vld [vmem:[#allocation6 + $0x2d0] sm:$0xff]
    %v193 = vld [vmem:[#allocation6 + $0x2d8] sm:$0xff]
    %v194 = vld [vmem:[#allocation6 + $0x2e0] sm:$0xff]
    %v195 = vld [vmem:[#allocation6 + $0x2e8] sm:$0xff]
    %v196 = vld [vmem:[#allocation6 + $0x2f0] sm:$0xff]
    %v197 = vld [vmem:[#allocation6 + $0x2f8] sm:$0xff]
    %v198 = vld [vmem:[#allocation6 + $0x300] sm:$0xff]
    %v199 = vld [vmem:[#allocation6 + $0x308] sm:$0xff]
    %v200 = vld [vmem:[#allocation6 + $0x310] sm:$0xff]
    %v201 = vld [vmem:[#allocation6 + $0x318] sm:$0xff]
    %v202 = vld [vmem:[#allocation6 + $0x320] sm:$0xff]
    %v203 = vld [vmem:[#allocation6 + $0x328] sm:$0xff]
    %v204 = vld [vmem:[#allocation6 + $0x330] sm:$0xff]
    %v205 = vld [vmem:[#allocation6 + $0x338] sm:$0xff]
    %v206 = vld [vmem:[#allocation6 + $0x340] sm:$0xff]
    %v207 = vld [vmem:[#allocation6 + $0x348] sm:$0xff]
    %v208 = vld [vmem:[#allocation6 + $0x350] sm:$0xff]
    %v209 = vld [vmem:[#allocation6 + $0x358] sm:$0xff]
    %v210 = vld [vmem:[#allocation6 + $0x360] sm:$0xff]
    %v211 = vld [vmem:[#allocation6 + $0x368] sm:$0xff]
    %v212 = vld [vmem:[#allocation6 + $0x370] sm:$0xff]
    %v213 = vld [vmem:[#allocation6 + $0x378] sm:$0xff]
    %v214 = vld [vmem:[#allocation6 + $0x380] sm:$0xff]
    %v215 = vld [vmem:[#allocation6 + $0x388] sm:$0xff]
    %v216 = vld [vmem:[#allocation6 + $0x390] sm:$0xff]
    %v217 = vld [vmem:[#allocation6 + $0x398] sm:$0xff]
    %v218 = vld [vmem:[#allocation6 + $0x3a0] sm:$0xff]
    %v219 = vld [vmem:[#allocation6 + $0x3a8] sm:$0xff]
    %v220 = vld [vmem:[#allocation6 + $0x3b0] sm:$0xff]
    %v221 = vld [vmem:[#allocation6 + $0x3b8] sm:$0xff]
    %v222 = vld [vmem:[#allocation6 + $0x3c0] sm:$0xff]
    %v223 = vld [vmem:[#allocation6 + $0x3c8] sm:$0xff]
    %v224 = vld [vmem:[#allocation6 + $0x3d0] sm:$0xff]
    %v225 = vld [vmem:[#allocation6 + $0x3d8] sm:$0xff]
    %v226 = vld [vmem:[#allocation6 + $0x3e0] sm:$0xff]
    %v227 = vld [vmem:[#allocation6 + $0x3e8] sm:$0xff]
    %v228 = vld [vmem:[#allocation6 + $0x3f0] sm:$0xff]
    %v229 = vld [vmem:[#allocation6 + $0x3f8] sm:$0xff]
    %v238 = vunpack.c.l.b16 %v94
    %v239 = vunpack.c.h.b16 %v94
    %v240 = vunpack.c.l.b16 %v95
    %v241 = vunpack.c.h.b16 %v95
    %v242 = vunpack.c.l.b16 %v96
    %v243 = vunpack.c.h.b16 %v96
    %v244 = vunpack.c.l.b16 %v97
    %v245 = vunpack.c.h.b16 %v97
    %v246 = vunpack.c.l.b16 %v98
    %v247 = vunpack.c.h.b16 %v98
    %v248 = vunpack.c.l.b16 %v99
    %v249 = vunpack.c.h.b16 %v99
    %v250 = vunpack.c.l.b16 %v100
    %v251 = vunpack.c.h.b16 %v100
    %v252 = vunpack.c.l.b16 %v101
    %v253 = vunpack.c.h.b16 %v101
    %v254 = vpack.c.b16 %v246, %v238
    %v255 = vpack.c.b16 %v247, %v239
    %v256 = vpack.c.b16 %v248, %v240
    %v257 = vpack.c.b16 %v249, %v241
    %v258 = vpack.c.b16 %v250, %v242
    %v259 = vpack.c.b16 %v251, %v243
    %v260 = vpack.c.b16 %v252, %v244
    %v261 = vpack.c.b16 %v253, %v245
    %v398 = vunpack.c.l.b16 %v102
    %v399 = vunpack.c.h.b16 %v102
    %v400 = vunpack.c.l.b16 %v103
    %v401 = vunpack.c.h.b16 %v103
    %v402 = vunpack.c.l.b16 %v104
    %v403 = vunpack.c.h.b16 %v104
    %v404 = vunpack.c.l.b16 %v105
    %v405 = vunpack.c.h.b16 %v105
    %v406 = vunpack.c.l.b16 %v106
    %v407 = vunpack.c.h.b16 %v106
    %v408 = vunpack.c.l.b16 %v107
    %v409 = vunpack.c.h.b16 %v107
    %v410 = vunpack.c.l.b16 %v108
    %v411 = vunpack.c.h.b16 %v108
    %v412 = vunpack.c.l.b16 %v109
    %v413 = vunpack.c.h.b16 %v109
    %v414 = vunpack.c.l.b16 %v110
    %v415 = vunpack.c.h.b16 %v110
    %v416 = vunpack.c.l.b16 %v111
    %v417 = vunpack.c.h.b16 %v111
    %v418 = vunpack.c.l.b16 %v112
    %v419 = vunpack.c.h.b16 %v112
    %v420 = vunpack.c.l.b16 %v113
    %v421 = vunpack.c.h.b16 %v113
    %v422 = vunpack.c.l.b16 %v114
    %v423 = vunpack.c.h.b16 %v114
    %v424 = vunpack.c.l.b16 %v115
    %v425 = vunpack.c.h.b16 %v115
    %v426 = vunpack.c.l.b16 %v116
    %v427 = vunpack.c.h.b16 %v116
    %v428 = vunpack.c.l.b16 %v117
    %v429 = vunpack.c.h.b16 %v117
    %v430 = vunpack.c.l.b16 %v118
    %v431 = vunpack.c.h.b16 %v118
    %v432 = vunpack.c.l.b16 %v119
    %v433 = vunpack.c.h.b16 %v119
    %v434 = vunpack.c.l.b16 %v120
    %v435 = vunpack.c.h.b16 %v120
    %v436 = vunpack.c.l.b16 %v121
    %v437 = vunpack.c.h.b16 %v121
    %v438 = vunpack.c.l.b16 %v122
    %v439 = vunpack.c.h.b16 %v122
    %v440 = vunpack.c.l.b16 %v123
    %v441 = vunpack.c.h.b16 %v123
    %v442 = vunpack.c.l.b16 %v124
    %v443 = vunpack.c.h.b16 %v124
    %v444 = vunpack.c.l.b16 %v125
    %v445 = vunpack.c.h.b16 %v125
    %v446 = vunpack.c.l.b16 %v126
    %v447 = vunpack.c.h.b16 %v126
    %v448 = vunpack.c.l.b16 %v127
    %v449 = vunpack.c.h.b16 %v127
    %v450 = vunpack.c.l.b16 %v128
    %v451 = vunpack.c.h.b16 %v128
    %v452 = vunpack.c.l.b16 %v129
    %v453 = vunpack.c.h.b16 %v129
    %v454 = vunpack.c.l.b16 %v130
    %v455 = vunpack.c.h.b16 %v130
    %v456 = vunpack.c.l.b16 %v131
    %v457 = vunpack.c.h.b16 %v131
    %v458 = vunpack.c.l.b16 %v132
    %v459 = vunpack.c.h.b16 %v132
    %v460 = vunpack.c.l.b16 %v133
    %v461 = vunpack.c.h.b16 %v133
    %v462 = vunpack.c.l.b16 %v134
    %v463 = vunpack.c.h.b16 %v134
    %v464 = vunpack.c.l.b16 %v135
    %v465 = vunpack.c.h.b16 %v135
    %v466 = vunpack.c.l.b16 %v136
    %v467 = vunpack.c.h.b16 %v136
    %v468 = vunpack.c.l.b16 %v137
    %v469 = vunpack.c.h.b16 %v137
    %v470 = vunpack.c.l.b16 %v138
    %v471 = vunpack.c.h.b16 %v138
    %v472 = vunpack.c.l.b16 %v139
    %v473 = vunpack.c.h.b16 %v139
    %v474 = vunpack.c.l.b16 %v140
    %v475 = vunpack.c.h.b16 %v140
    %v476 = vunpack.c.l.b16 %v141
    %v477 = vunpack.c.h.b16 %v141
    %v478 = vunpack.c.l.b16 %v142
    %v479 = vunpack.c.h.b16 %v142
    %v480 = vunpack.c.l.b16 %v143
    %v481 = vunpack.c.h.b16 %v143
    %v482 = vunpack.c.l.b16 %v144
    %v483 = vunpack.c.h.b16 %v144
    %v484 = vunpack.c.l.b16 %v145
    %v485 = vunpack.c.h.b16 %v145
    %v486 = vunpack.c.l.b16 %v146
    %v487 = vunpack.c.h.b16 %v146
    %v488 = vunpack.c.l.b16 %v147
    %v489 = vunpack.c.h.b16 %v147
    %v490 = vunpack.c.l.b16 %v148
    %v491 = vunpack.c.h.b16 %v148
    %v492 = vunpack.c.l.b16 %v149
    %v493 = vunpack.c.h.b16 %v149
    %v494 = vunpack.c.l.b16 %v150
    %v495 = vunpack.c.h.b16 %v150
    %v496 = vunpack.c.l.b16 %v151
    %v497 = vunpack.c.h.b16 %v151
    %v498 = vunpack.c.l.b16 %v152
    %v499 = vunpack.c.h.b16 %v152
    %v500 = vunpack.c.l.b16 %v153
    %v501 = vunpack.c.h.b16 %v153
    %v502 = vunpack.c.l.b16 %v154
    %v503 = vunpack.c.h.b16 %v154
    %v504 = vunpack.c.l.b16 %v155
    %v505 = vunpack.c.h.b16 %v155
    %v506 = vunpack.c.l.b16 %v156
    %v507 = vunpack.c.h.b16 %v156
    %v508 = vunpack.c.l.b16 %v157
    %v509 = vunpack.c.h.b16 %v157
    %v510 = vunpack.c.l.b16 %v158
    %v511 = vunpack.c.h.b16 %v158
    %v512 = vunpack.c.l.b16 %v159
    %v513 = vunpack.c.h.b16 %v159
    %v514 = vunpack.c.l.b16 %v160
    %v515 = vunpack.c.h.b16 %v160
    %v516 = vunpack.c.l.b16 %v161
    %v517 = vunpack.c.h.b16 %v161
    %v518 = vunpack.c.l.b16 %v162
    %v519 = vunpack.c.h.b16 %v162
    %v520 = vunpack.c.l.b16 %v163
    %v521 = vunpack.c.h.b16 %v163
    %v522 = vunpack.c.l.b16 %v164
    %v523 = vunpack.c.h.b16 %v164
    %v524 = vunpack.c.l.b16 %v165
    %v525 = vunpack.c.h.b16 %v165
    %v526 = vunpack.c.l.b16 %v166
    %v527 = vunpack.c.h.b16 %v166
    %v528 = vunpack.c.l.b16 %v167
    %v529 = vunpack.c.h.b16 %v167
    %v530 = vunpack.c.l.b16 %v168
    %v531 = vunpack.c.h.b16 %v168
    %v532 = vunpack.c.l.b16 %v169
    %v533 = vunpack.c.h.b16 %v169
    %v534 = vunpack.c.l.b16 %v170
    %v535 = vunpack.c.h.b16 %v170
    %v536 = vunpack.c.l.b16 %v171
    %v537 = vunpack.c.h.b16 %v171
    %v538 = vunpack.c.l.b16 %v172
    %v539 = vunpack.c.h.b16 %v172
    %v540 = vunpack.c.l.b16 %v173
    %v541 = vunpack.c.h.b16 %v173
    %v542 = vunpack.c.l.b16 %v174
    %v543 = vunpack.c.h.b16 %v174
    %v544 = vunpack.c.l.b16 %v175
    %v545 = vunpack.c.h.b16 %v175
    %v546 = vunpack.c.l.b16 %v176
    %v547 = vunpack.c.h.b16 %v176
    %v548 = vunpack.c.l.b16 %v177
    %v549 = vunpack.c.h.b16 %v177
    %v550 = vunpack.c.l.b16 %v178
    %v551 = vunpack.c.h.b16 %v178
    %v552 = vunpack.c.l.b16 %v179
    %v553 = vunpack.c.h.b16 %v179
    %v554 = vunpack.c.l.b16 %v180
    %v555 = vunpack.c.h.b16 %v180
    %v556 = vunpack.c.l.b16 %v181
    %v557 = vunpack.c.h.b16 %v181
    %v558 = vunpack.c.l.b16 %v182
    %v559 = vunpack.c.h.b16 %v182
    %v560 = vunpack.c.l.b16 %v183
    %v561 = vunpack.c.h.b16 %v183
    %v562 = vunpack.c.l.b16 %v184
    %v563 = vunpack.c.h.b16 %v184
    %v564 = vunpack.c.l.b16 %v185
    %v565 = vunpack.c.h.b16 %v185
    %v566 = vunpack.c.l.b16 %v186
    %v567 = vunpack.c.h.b16 %v186
    %v568 = vunpack.c.l.b16 %v187
    %v569 = vunpack.c.h.b16 %v187
    %v570 = vunpack.c.l.b16 %v188
    %v571 = vunpack.c.h.b16 %v188
    %v572 = vunpack.c.l.b16 %v189
    %v573 = vunpack.c.h.b16 %v189
    %v574 = vunpack.c.l.b16 %v190
    %v575 = vunpack.c.h.b16 %v190
    %v576 = vunpack.c.l.b16 %v191
    %v577 = vunpack.c.h.b16 %v191
    %v578 = vunpack.c.l.b16 %v192
    %v579 = vunpack.c.h.b16 %v192
    %v580 = vunpack.c.l.b16 %v193
    %v581 = vunpack.c.h.b16 %v193
    %v582 = vunpack.c.l.b16 %v194
    %v583 = vunpack.c.h.b16 %v194
    %v584 = vunpack.c.l.b16 %v195
    %v585 = vunpack.c.h.b16 %v195
    %v586 = vunpack.c.l.b16 %v196
    %v587 = vunpack.c.h.b16 %v196
    %v588 = vunpack.c.l.b16 %v197
    %v589 = vunpack.c.h.b16 %v197
    %v590 = vunpack.c.l.b16 %v198
    %v591 = vunpack.c.h.b16 %v198
    %v592 = vunpack.c.l.b16 %v199
    %v593 = vunpack.c.h.b16 %v199
    %v594 = vunpack.c.l.b16 %v200
    %v595 = vunpack.c.h.b16 %v200
    %v596 = vunpack.c.l.b16 %v201
    %v597 = vunpack.c.h.b16 %v201
    %v598 = vunpack.c.l.b16 %v202
    %v599 = vunpack.c.h.b16 %v202
    %v600 = vunpack.c.l.b16 %v203
    %v601 = vunpack.c.h.b16 %v203
    %v602 = vunpack.c.l.b16 %v204
    %v603 = vunpack.c.h.b16 %v204
    %v604 = vunpack.c.l.b16 %v205
    %v605 = vunpack.c.h.b16 %v205
    %v606 = vunpack.c.l.b16 %v206
    %v607 = vunpack.c.h.b16 %v206
    %v608 = vunpack.c.l.b16 %v207
    %v609 = vunpack.c.h.b16 %v207
    %v610 = vunpack.c.l.b16 %v208
    %v611 = vunpack.c.h.b16 %v208
    %v612 = vunpack.c.l.b16 %v209
    %v613 = vunpack.c.h.b16 %v209
    %v614 = vunpack.c.l.b16 %v210
    %v615 = vunpack.c.h.b16 %v210
    %v616 = vunpack.c.l.b16 %v211
    %v617 = vunpack.c.h.b16 %v211
    %v618 = vunpack.c.l.b16 %v212
    %v619 = vunpack.c.h.b16 %v212
    %v620 = vunpack.c.l.b16 %v213
    %v621 = vunpack.c.h.b16 %v213
    %v622 = vunpack.c.l.b16 %v214
    %v623 = vunpack.c.h.b16 %v214
    %v624 = vunpack.c.l.b16 %v215
    %v625 = vunpack.c.h.b16 %v215
    %v626 = vunpack.c.l.b16 %v216
    %v627 = vunpack.c.h.b16 %v216
    %v628 = vunpack.c.l.b16 %v217
    %v629 = vunpack.c.h.b16 %v217
    %v630 = vunpack.c.l.b16 %v218
    %v631 = vunpack.c.h.b16 %v218
    %v632 = vunpack.c.l.b16 %v219
    %v633 = vunpack.c.h.b16 %v219
    %v634 = vunpack.c.l.b16 %v220
    %v635 = vunpack.c.h.b16 %v220
    %v636 = vunpack.c.l.b16 %v221
    %v637 = vunpack.c.h.b16 %v221
    %v638 = vunpack.c.l.b16 %v222
    %v639 = vunpack.c.h.b16 %v222
    %v640 = vunpack.c.l.b16 %v223
    %v641 = vunpack.c.h.b16 %v223
    %v642 = vunpack.c.l.b16 %v224
    %v643 = vunpack.c.h.b16 %v224
    %v644 = vunpack.c.l.b16 %v225
    %v645 = vunpack.c.h.b16 %v225
    %v646 = vunpack.c.l.b16 %v226
    %v647 = vunpack.c.h.b16 %v226
    %v648 = vunpack.c.l.b16 %v227
    %v649 = vunpack.c.h.b16 %v227
    %v650 = vunpack.c.l.b16 %v228
    %v651 = vunpack.c.h.b16 %v228
    %v652 = vunpack.c.l.b16 %v229
    %v653 = vunpack.c.h.b16 %v229
    %v654 = vpack.c.b16 %v400, %v398
    %v655 = vpack.c.b16 %v401, %v399
    %v656 = vpack.c.b16 %v404, %v402
    %v657 = vpack.c.b16 %v405, %v403
    %v658 = vpack.c.b16 %v408, %v406
    %v659 = vpack.c.b16 %v409, %v407
    %v660 = vpack.c.b16 %v412, %v410
    %v661 = vpack.c.b16 %v413, %v411
    %v662 = vpack.c.b16 %v416, %v414
    %v663 = vpack.c.b16 %v417, %v415
    %v664 = vpack.c.b16 %v420, %v418
    %v665 = vpack.c.b16 %v421, %v419
    %v666 = vpack.c.b16 %v424, %v422
    %v667 = vpack.c.b16 %v425, %v423
    %v668 = vpack.c.b16 %v428, %v426
    %v669 = vpack.c.b16 %v429, %v427
    %v670 = vpack.c.b16 %v432, %v430
    %v671 = vpack.c.b16 %v433, %v431
    %v672 = vpack.c.b16 %v436, %v434
    %v673 = vpack.c.b16 %v437, %v435
    %v674 = vpack.c.b16 %v440, %v438
    %v675 = vpack.c.b16 %v441, %v439
    %v676 = vpack.c.b16 %v444, %v442
    %v677 = vpack.c.b16 %v445, %v443
    %v678 = vpack.c.b16 %v448, %v446
    %v679 = vpack.c.b16 %v449, %v447
    %v680 = vpack.c.b16 %v452, %v450
    %v681 = vpack.c.b16 %v453, %v451
    %v682 = vpack.c.b16 %v456, %v454
    %v683 = vpack.c.b16 %v457, %v455
    %v684 = vpack.c.b16 %v460, %v458
    %v685 = vpack.c.b16 %v461, %v459
    %v686 = vpack.c.b16 %v464, %v462
    %v687 = vpack.c.b16 %v465, %v463
    %v688 = vpack.c.b16 %v468, %v466
    %v689 = vpack.c.b16 %v469, %v467
    %v690 = vpack.c.b16 %v472, %v470
    %v691 = vpack.c.b16 %v473, %v471
    %v692 = vpack.c.b16 %v476, %v474
    %v693 = vpack.c.b16 %v477, %v475
    %v694 = vpack.c.b16 %v480, %v478
    %v695 = vpack.c.b16 %v481, %v479
    %v696 = vpack.c.b16 %v484, %v482
    %v697 = vpack.c.b16 %v485, %v483
    %v698 = vpack.c.b16 %v488, %v486
    %v699 = vpack.c.b16 %v489, %v487
    %v700 = vpack.c.b16 %v492, %v490
    %v701 = vpack.c.b16 %v493, %v491
    %v702 = vpack.c.b16 %v496, %v494
    %v703 = vpack.c.b16 %v497, %v495
    %v704 = vpack.c.b16 %v500, %v498
    %v705 = vpack.c.b16 %v501, %v499
    %v706 = vpack.c.b16 %v504, %v502
    %v707 = vpack.c.b16 %v505, %v503
    %v708 = vpack.c.b16 %v508, %v506
    %v709 = vpack.c.b16 %v509, %v507
    %v710 = vpack.c.b16 %v512, %v510
    %v711 = vpack.c.b16 %v513, %v511
    %v712 = vpack.c.b16 %v516, %v514
    %v713 = vpack.c.b16 %v517, %v515
    %v714 = vpack.c.b16 %v520, %v518
    %v715 = vpack.c.b16 %v521, %v519
    %v716 = vpack.c.b16 %v524, %v522
    %v717 = vpack.c.b16 %v525, %v523
    %v718 = vpack.c.b16 %v528, %v526
    %v719 = vpack.c.b16 %v529, %v527
    %v720 = vpack.c.b16 %v532, %v530
    %v721 = vpack.c.b16 %v533, %v531
    %v722 = vpack.c.b16 %v536, %v534
    %v723 = vpack.c.b16 %v537, %v535
    %v724 = vpack.c.b16 %v540, %v538
    %v725 = vpack.c.b16 %v541, %v539
    %v726 = vpack.c.b16 %v544, %v542
    %v727 = vpack.c.b16 %v545, %v543
    %v728 = vpack.c.b16 %v548, %v546
    %v729 = vpack.c.b16 %v549, %v547
    %v730 = vpack.c.b16 %v552, %v550
    %v731 = vpack.c.b16 %v553, %v551
    %v732 = vpack.c.b16 %v556, %v554
    %v733 = vpack.c.b16 %v557, %v555
    %v734 = vpack.c.b16 %v560, %v558
    %v735 = vpack.c.b16 %v561, %v559
    %v736 = vpack.c.b16 %v564, %v562
    %v737 = vpack.c.b16 %v565, %v563
    %v738 = vpack.c.b16 %v568, %v566
    %v739 = vpack.c.b16 %v569, %v567
    %v740 = vpack.c.b16 %v572, %v570
    %v741 = vpack.c.b16 %v573, %v571
    %v742 = vpack.c.b16 %v576, %v574
    %v743 = vpack.c.b16 %v577, %v575
    %v744 = vpack.c.b16 %v580, %v578
    %v745 = vpack.c.b16 %v581, %v579
    %v746 = vpack.c.b16 %v584, %v582
    %v747 = vpack.c.b16 %v585, %v583
    %v748 = vpack.c.b16 %v588, %v586
    %v749 = vpack.c.b16 %v589, %v587
    %v750 = vpack.c.b16 %v592, %v590
    %v751 = vpack.c.b16 %v593, %v591
    %v752 = vpack.c.b16 %v596, %v594
    %v753 = vpack.c.b16 %v597, %v595
    %v754 = vpack.c.b16 %v600, %v598
    %v755 = vpack.c.b16 %v601, %v599
    %v756 = vpack.c.b16 %v604, %v602
    %v757 = vpack.c.b16 %v605, %v603
    %v758 = vpack.c.b16 %v608, %v606
    %v759 = vpack.c.b16 %v609, %v607
    %v760 = vpack.c.b16 %v612, %v610
    %v761 = vpack.c.b16 %v613, %v611
    %v762 = vpack.c.b16 %v616, %v614
    %v763 = vpack.c.b16 %v617, %v615
    %v764 = vpack.c.b16 %v620, %v618
    %v765 = vpack.c.b16 %v621, %v619
    %v766 = vpack.c.b16 %v624, %v622
    %v767 = vpack.c.b16 %v625, %v623
    %v768 = vpack.c.b16 %v628, %v626
    %v769 = vpack.c.b16 %v629, %v627
    %v770 = vpack.c.b16 %v632, %v630
    %v771 = vpack.c.b16 %v633, %v631
    %v772 = vpack.c.b16 %v636, %v634
    %v773 = vpack.c.b16 %v637, %v635
    %v774 = vpack.c.b16 %v640, %v638
    %v775 = vpack.c.b16 %v641, %v639
    %v776 = vpack.c.b16 %v644, %v642
    %v777 = vpack.c.b16 %v645, %v643
    %v778 = vpack.c.b16 %v648, %v646
    %v779 = vpack.c.b16 %v649, %v647
    %v780 = vpack.c.b16 %v652, %v650
    %v781 = vpack.c.b16 %v653, %v651
    %910 = vmatpush.bf16.msra.mxu0 %v668
    %911 = vmatpush.bf16.msra.mxu0 %v666
    %912 = vmatpush.bf16.msra.mxu0 %v664
    %913 = vmatpush.bf16.msra.mxu0 %v662
    %914 = vmatpush.bf16.msra.mxu0 %v660
    %915 = vmatpush.bf16.msra.mxu0 %v658
    %916 = vmatpush.bf16.msra.mxu0 %v656
    %917 = vmatpush.bf16.msra.mxu0 %v654
    %918 = vmatmul.bf16.gmra.mxu0 %v254
    %v919 = vpop.f32.mrf.mxu0
    %v920 = vadd.f32 0.0, %v919
    %v921 = vpop.f32.mrf.mxu0
    %v922 = vadd.f32 0.0, %v921
    %923 = vdwg.mxu0
    %924 = vmatpush.bf16.msra.mxu0 %v684
    %925 = vmatpush.bf16.msra.mxu0 %v682
    %926 = vmatpush.bf16.msra.mxu0 %v680
    %927 = vmatpush.bf16.msra.mxu0 %v678
    %928 = vmatpush.bf16.msra.mxu0 %v676
    %929 = vmatpush.bf16.msra.mxu0 %v674
    %930 = vmatpush.bf16.msra.mxu0 %v672
    %931 = vmatpush.bf16.msra.mxu0 %v670
    %932 = vmatmul.bf16.gmra.mxu0 %v255
    %v933 = vpop.f32.mrf.mxu0
    %v934 = vadd.f32 %v920, %v933
    %v935 = vpop.f32.mrf.mxu0
    %v936 = vadd.f32 %v922, %v935
    %937 = vdwg.mxu0
    %938 = vmatpush.bf16.msra.mxu0 %v700
    %939 = vmatpush.bf16.msra.mxu0 %v698
    %940 = vmatpush.bf16.msra.mxu0 %v696
    %941 = vmatpush.bf16.msra.mxu0 %v694
    %942 = vmatpush.bf16.msra.mxu0 %v692
    %943 = vmatpush.bf16.msra.mxu0 %v690
    %944 = vmatpush.bf16.msra.mxu0 %v688
    %945 = vmatpush.bf16.msra.mxu0 %v686
    %946 = vmatmul.bf16.gmra.mxu0 %v256
    %v947 = vpop.f32.mrf.mxu0
    %v948 = vadd.f32 %v934, %v947
    %v949 = vpop.f32.mrf.mxu0
    %v950 = vadd.f32 %v936, %v949
    %951 = vdwg.mxu0
    %952 = vmatpush.bf16.msra.mxu0 %v716
    %953 = vmatpush.bf16.msra.mxu0 %v714
    %954 = vmatpush.bf16.msra.mxu0 %v712
    %955 = vmatpush.bf16.msra.mxu0 %v710
    %956 = vmatpush.bf16.msra.mxu0 %v708
    %957 = vmatpush.bf16.msra.mxu0 %v706
    %958 = vmatpush.bf16.msra.mxu0 %v704
    %959 = vmatpush.bf16.msra.mxu0 %v702
    %960 = vmatmul.bf16.gmra.mxu0 %v257
    %v961 = vpop.f32.mrf.mxu0
    %v962 = vadd.f32 %v948, %v961
    %v963 = vpop.f32.mrf.mxu0
    %v964 = vadd.f32 %v950, %v963
    %965 = vdwg.mxu0
    %966 = vmatpush.bf16.msra.mxu0 %v732
    %967 = vmatpush.bf16.msra.mxu0 %v730
    %968 = vmatpush.bf16.msra.mxu0 %v728
    %969 = vmatpush.bf16.msra.mxu0 %v726
    %970 = vmatpush.bf16.msra.mxu0 %v724
    %971 = vmatpush.bf16.msra.mxu0 %v722
    %972 = vmatpush.bf16.msra.mxu0 %v720
    %973 = vmatpush.bf16.msra.mxu0 %v718
    %974 = vmatmul.bf16.gmra.mxu0 %v258
    %v975 = vpop.f32.mrf.mxu0
    %v976 = vadd.f32 %v962, %v975
    %v977 = vpop.f32.mrf.mxu0
    %v978 = vadd.f32 %v964, %v977
    %979 = vdwg.mxu0
    %980 = vmatpush.bf16.msra.mxu0 %v748
    %981 = vmatpush.bf16.msra.mxu0 %v746
    %982 = vmatpush.bf16.msra.mxu0 %v744
    %983 = vmatpush.bf16.msra.mxu0 %v742
    %984 = vmatpush.bf16.msra.mxu0 %v740
    %985 = vmatpush.bf16.msra.mxu0 %v738
    %986 = vmatpush.bf16.msra.mxu0 %v736
    %987 = vmatpush.bf16.msra.mxu0 %v734
    %988 = vmatmul.bf16.gmra.mxu0 %v259
    %v989 = vpop.f32.mrf.mxu0
    %v990 = vadd.f32 %v976, %v989
    %v991 = vpop.f32.mrf.mxu0
    %v992 = vadd.f32 %v978, %v991
    %993 = vdwg.mxu0
    %994 = vmatpush.bf16.msra.mxu0 %v764
    %995 = vmatpush.bf16.msra.mxu0 %v762
    %996 = vmatpush.bf16.msra.mxu0 %v760
    %997 = vmatpush.bf16.msra.mxu0 %v758
    %998 = vmatpush.bf16.msra.mxu0 %v756
    %999 = vmatpush.bf16.msra.mxu0 %v754
    %1000 = vmatpush.bf16.msra.mxu0 %v752
    %1001 = vmatpush.bf16.msra.mxu0 %v750
    %1002 = vmatmul.bf16.gmra.mxu0 %v260
    %v1003 = vpop.f32.mrf.mxu0
    %v1004 = vadd.f32 %v990, %v1003
    %v1005 = vpop.f32.mrf.mxu0
    %v1006 = vadd.f32 %v992, %v1005
    %1007 = vdwg.mxu0
    %1008 = vmatpush.bf16.msra.mxu0 %v780
    %1009 = vmatpush.bf16.msra.mxu0 %v778
    %1010 = vmatpush.bf16.msra.mxu0 %v776
    %1011 = vmatpush.bf16.msra.mxu0 %v774
    %1012 = vmatpush.bf16.msra.mxu0 %v772
    %1013 = vmatpush.bf16.msra.mxu0 %v770
    %1014 = vmatpush.bf16.msra.mxu0 %v768
    %1015 = vmatpush.bf16.msra.mxu0 %v766
    %1016 = vmatmul.bf16.gmra.mxu0 %v261
    %v1017 = vpop.f32.mrf.mxu0
    %v1018 = vadd.f32 %v1004, %v1017
    %v1019 = vpop.f32.mrf.mxu0
    %v1020 = vadd.f32 %v1006, %v1019
    %1021 = vdwg.mxu0
    %1022 = vmatpush.bf16.msra.mxu0 %v669
    %1023 = vmatpush.bf16.msra.mxu0 %v667
    %1024 = vmatpush.bf16.msra.mxu0 %v665
    %1025 = vmatpush.bf16.msra.mxu0 %v663
    %1026 = vmatpush.bf16.msra.mxu0 %v661
    %1027 = vmatpush.bf16.msra.mxu0 %v659
    %1028 = vmatpush.bf16.msra.mxu0 %v657
    %1029 = vmatpush.bf16.msra.mxu0 %v655
    %1030 = vmatmul.bf16.gmra.mxu0 %v254
    %v1031 = vpop.f32.mrf.mxu0
    %v1032 = vadd.f32 0.0, %v1031
    %v1033 = vpop.f32.mrf.mxu0
    %v1034 = vadd.f32 0.0, %v1033
    %1035 = vdwg.mxu0
    %1036 = vmatpush.bf16.msra.mxu0 %v685
    %1037 = vmatpush.bf16.msra.mxu0 %v683
    %1038 = vmatpush.bf16.msra.mxu0 %v681
    %1039 = vmatpush.bf16.msra.mxu0 %v679
    %1040 = vmatpush.bf16.msra.mxu0 %v677
    %1041 = vmatpush.bf16.msra.mxu0 %v675
    %1042 = vmatpush.bf16.msra.mxu0 %v673
    %1043 = vmatpush.bf16.msra.mxu0 %v671
    %1044 = vmatmul.bf16.gmra.mxu0 %v255
    %v1045 = vpop.f32.mrf.mxu0
    %v1046 = vadd.f32 %v1032, %v1045
    %v1047 = vpop.f32.mrf.mxu0
    %v1048 = vadd.f32 %v1034, %v1047
    %1049 = vdwg.mxu0
    %1050 = vmatpush.bf16.msra.mxu0 %v701
    %1051 = vmatpush.bf16.msra.mxu0 %v699
    %1052 = vmatpush.bf16.msra.mxu0 %v697
    %1053 = vmatpush.bf16.msra.mxu0 %v695
    %1054 = vmatpush.bf16.msra.mxu0 %v693
    %1055 = vmatpush.bf16.msra.mxu0 %v691
    %1056 = vmatpush.bf16.msra.mxu0 %v689
    %1057 = vmatpush.bf16.msra.mxu0 %v687
    %1058 = vmatmul.bf16.gmra.mxu0 %v256
    %v1059 = vpop.f32.mrf.mxu0
    %v1060 = vadd.f32 %v1046, %v1059
    %v1061 = vpop.f32.mrf.mxu0
    %v1062 = vadd.f32 %v1048, %v1061
    %1063 = vdwg.mxu0
    %1064 = vmatpush.bf16.msra.mxu0 %v717
    %1065 = vmatpush.bf16.msra.mxu0 %v715
    %1066 = vmatpush.bf16.msra.mxu0 %v713
    %1067 = vmatpush.bf16.msra.mxu0 %v711
    %1068 = vmatpush.bf16.msra.mxu0 %v709
    %1069 = vmatpush.bf16.msra.mxu0 %v707
    %1070 = vmatpush.bf16.msra.mxu0 %v705
    %1071 = vmatpush.bf16.msra.mxu0 %v703
    %1072 = vmatmul.bf16.gmra.mxu0 %v257
    %v1073 = vpop.f32.mrf.mxu0
    %v1074 = vadd.f32 %v1060, %v1073
    %v1075 = vpop.f32.mrf.mxu0
    %v1076 = vadd.f32 %v1062, %v1075
    %1077 = vdwg.mxu0
    %1078 = vmatpush.bf16.msra.mxu0 %v733
    %1079 = vmatpush.bf16.msra.mxu0 %v731
    %1080 = vmatpush.bf16.msra.mxu0 %v729
    %1081 = vmatpush.bf16.msra.mxu0 %v727
    %1082 = vmatpush.bf16.msra.mxu0 %v725
    %1083 = vmatpush.bf16.msra.mxu0 %v723
    %1084 = vmatpush.bf16.msra.mxu0 %v721
    %1085 = vmatpush.bf16.msra.mxu0 %v719
    %1086 = vmatmul.bf16.gmra.mxu0 %v258
    %v1087 = vpop.f32.mrf.mxu0
    %v1088 = vadd.f32 %v1074, %v1087
    %v1089 = vpop.f32.mrf.mxu0
    %v1090 = vadd.f32 %v1076, %v1089
    %1091 = vdwg.mxu0
    %1092 = vmatpush.bf16.msra.mxu0 %v749
    %1093 = vmatpush.bf16.msra.mxu0 %v747
    %1094 = vmatpush.bf16.msra.mxu0 %v745
    %1095 = vmatpush.bf16.msra.mxu0 %v743
    %1096 = vmatpush.bf16.msra.mxu0 %v741
    %1097 = vmatpush.bf16.msra.mxu0 %v739
    %1098 = vmatpush.bf16.msra.mxu0 %v737
    %1099 = vmatpush.bf16.msra.mxu0 %v735
    %1100 = vmatmul.bf16.gmra.mxu0 %v259
    %v1101 = vpop.f32.mrf.mxu0
    %v1102 = vadd.f32 %v1088, %v1101
    %v1103 = vpop.f32.mrf.mxu0
    %v1104 = vadd.f32 %v1090, %v1103
    %1105 = vdwg.mxu0
    %1106 = vmatpush.bf16.msra.mxu0 %v765
    %1107 = vmatpush.bf16.msra.mxu0 %v763
    %1108 = vmatpush.bf16.msra.mxu0 %v761
    %1109 = vmatpush.bf16.msra.mxu0 %v759
    %1110 = vmatpush.bf16.msra.mxu0 %v757
    %1111 = vmatpush.bf16.msra.mxu0 %v755
    %1112 = vmatpush.bf16.msra.mxu0 %v753
    %1113 = vmatpush.bf16.msra.mxu0 %v751
    %1114 = vmatmul.bf16.gmra.mxu0 %v260
    %v1115 = vpop.f32.mrf.mxu0
    %v1116 = vadd.f32 %v1102, %v1115
    %v1117 = vpop.f32.mrf.mxu0
    %v1118 = vadd.f32 %v1104, %v1117
    %1119 = vdwg.mxu0
    %1120 = vmatpush.bf16.msra.mxu0 %v781
    %1121 = vmatpush.bf16.msra.mxu0 %v779
    %1122 = vmatpush.bf16.msra.mxu0 %v777
    %1123 = vmatpush.bf16.msra.mxu0 %v775
    %1124 = vmatpush.bf16.msra.mxu0 %v773
    %1125 = vmatpush.bf16.msra.mxu0 %v771
    %1126 = vmatpush.bf16.msra.mxu0 %v769
    %1127 = vmatpush.bf16.msra.mxu0 %v767
    %1128 = vmatmul.bf16.gmra.mxu0 %v261
    %v1129 = vpop.f32.mrf.mxu0
    %v1130 = vadd.f32 %v1116, %v1129
    %v1131 = vpop.f32.mrf.mxu0
    %v1132 = vadd.f32 %v1118, %v1131
    %1133 = vdwg.mxu0
    %v1134 = vadd.f32 %v90, %v1018
    %v1135 = vadd.f32 %v91, %v1130
    %v1136 = vadd.f32 %v92, %v1020
    %v1137 = vadd.f32 %v93, %v1132
    %1138 = vst [vmem:[#allocation2] sm:$0xff] %v1134
    %1139 = vst [vmem:[#allocation2 + $0x8] sm:$0xff] %v1135
    %1140 = vst [vmem:[#allocation2 + $0x10] sm:$0xff] %v1136
    %1141 = vst [vmem:[#allocation2 + $0x18] sm:$0xff] %v1137
    // Predicated region
    $region42: #{tpu_custom_call.1} parent=1 // pred_check
      %p1142 = pneg %p82
    $region43: #{tpu_custom_call.1} parent=1 // pred_check_branch
      %1144 = sbr.rel (%p1142) target = $region45
    $region44: #{tpu_custom_call.1} parent=1 // pred_region
      %v1145 = vld [vmem:[#allocation2] sm:$0xff]
      %v1146 = vld [vmem:[#allocation2 + $0x8] sm:$0xff]
      %v1147 = vld [vmem:[#allocation2 + $0x10] sm:$0xff]
      %v1148 = vld [vmem:[#allocation2 + $0x18] sm:$0xff]
      %v1149 = vld [vmem:[#allocation8] sm:$0x3]
      %v1151 = vperm.slane %v1149, 0
      %v1152 = vperm.slane %v1149, 1
      %v1155 = vadd.f32 %v1145, %v1151
      %v1156 = vadd.f32 %v1146, %v1152
      %v1157 = vadd.f32 %v1147, %v1151
      %v1158 = vadd.f32 %v1148, %v1152
      %v1159 = vmax.f32 %v1155, 0.0
      %v1160 = vmax.f32 %v1156, 0.0
      %v1161 = vmax.f32 %v1157, 0.0
      %v1162 = vmax.f32 %v1158, 0.0
      %v1163 = vpack.c.bf16 %v1161, %v1159
      %v1164 = vpack.c.bf16 %v1162, %v1160
      %v1165 = vld [vmem:[#allocation9] sm:$0xf]
      %v1166 = vld [vmem:[#allocation9 + $0x4] sm:$0xf]
      %v1167 = vld [vmem:[#allocation9 + $0x8] sm:$0xf]
      %v1168 = vld [vmem:[#allocation9 + $0xc] sm:$0xf]
      %v1169 = vld [vmem:[#allocation9 + $0x10] sm:$0xf]
      %v1170 = vld [vmem:[#allocation9 + $0x14] sm:$0xf]
      %v1171 = vld [vmem:[#allocation9 + $0x18] sm:$0xf]
      %v1172 = vld [vmem:[#allocation9 + $0x1c] sm:$0xf]
      %v1173 = vld [vmem:[#allocation9 + $0x20] sm:$0xf]
      %v1174 = vld [vmem:[#allocation9 + $0x24] sm:$0xf]
      %v1175 = vld [vmem:[#allocation9 + $0x28] sm:$0xf]
      %v1176 = vld [vmem:[#allocation9 + $0x2c] sm:$0xf]
      %v1177 = vld [vmem:[#allocation9 + $0x30] sm:$0xf]
      %v1178 = vld [vmem:[#allocation9 + $0x34] sm:$0xf]
      %v1179 = vld [vmem:[#allocation9 + $0x38] sm:$0xf]
      %v1180 = vld [vmem:[#allocation9 + $0x3c] sm:$0xf]
      %v1181 = vld [vmem:[#allocation9 + $0x40] sm:$0xf]
      %v1182 = vld [vmem:[#allocation9 + $0x44] sm:$0xf]
      %v1183 = vld [vmem:[#allocation9 + $0x48] sm:$0xf]
      %v1184 = vld [vmem:[#allocation9 + $0x4c] sm:$0xf]
      %v1185 = vld [vmem:[#allocation9 + $0x50] sm:$0xf]
      %v1186 = vld [vmem:[#allocation9 + $0x54] sm:$0xf]
      %v1187 = vld [vmem:[#allocation9 + $0x58] sm:$0xf]
      %v1188 = vld [vmem:[#allocation9 + $0x5c] sm:$0xf]
      %v1189 = vld [vmem:[#allocation9 + $0x60] sm:$0xf]
      %v1190 = vld [vmem:[#allocation9 + $0x64] sm:$0xf]
      %v1191 = vld [vmem:[#allocation9 + $0x68] sm:$0xf]
      %v1192 = vld [vmem:[#allocation9 + $0x6c] sm:$0xf]
      %v1193 = vld [vmem:[#allocation9 + $0x70] sm:$0xf]
      %v1194 = vld [vmem:[#allocation9 + $0x74] sm:$0xf]
      %v1195 = vld [vmem:[#allocation9 + $0x78] sm:$0xf]
      %v1196 = vld [vmem:[#allocation9 + $0x7c] sm:$0xf]
      %v1197 = vld [vmem:[%s4] sm:$0x1]
      %v1199 = vperm.slane %v1197, 0
      %v1233 = vunpack.c.l.b16 %v1165
      %v1234 = vunpack.c.l.b16 %v1166
      %v1235 = vunpack.c.l.b16 %v1167
      %v1236 = vunpack.c.l.b16 %v1168
      %v1237 = vunpack.c.l.b16 %v1169
      %v1238 = vunpack.c.l.b16 %v1170
      %v1239 = vunpack.c.l.b16 %v1171
      %v1240 = vunpack.c.l.b16 %v1172
      %v1241 = vunpack.c.l.b16 %v1173
      %v1242 = vunpack.c.l.b16 %v1174
      %v1243 = vunpack.c.l.b16 %v1175
      %v1244 = vunpack.c.l.b16 %v1176
      %v1245 = vunpack.c.l.b16 %v1177
      %v1246 = vunpack.c.l.b16 %v1178
      %v1247 = vunpack.c.l.b16 %v1179
      %v1248 = vunpack.c.l.b16 %v1180
      %v1249 = vunpack.c.l.b16 %v1181
      %v1250 = vunpack.c.l.b16 %v1182
      %v1251 = vunpack.c.l.b16 %v1183
      %v1252 = vunpack.c.l.b16 %v1184
      %v1253 = vunpack.c.l.b16 %v1185
      %v1254 = vunpack.c.l.b16 %v1186
      %v1255 = vunpack.c.l.b16 %v1187
      %v1256 = vunpack.c.l.b16 %v1188
      %v1257 = vunpack.c.l.b16 %v1189
      %v1258 = vunpack.c.l.b16 %v1190
      %v1259 = vunpack.c.l.b16 %v1191
      %v1260 = vunpack.c.l.b16 %v1192
      %v1261 = vunpack.c.l.b16 %v1193
      %v1262 = vunpack.c.l.b16 %v1194
      %v1263 = vunpack.c.l.b16 %v1195
      %v1264 = vunpack.c.l.b16 %v1196
      %v1265 = vpack.c.b16 %v1234, %v1233
      %v1266 = vpack.c.b16 %v1236, %v1235
      %v1267 = vpack.c.b16 %v1238, %v1237
      %v1268 = vpack.c.b16 %v1240, %v1239
      %v1269 = vpack.c.b16 %v1242, %v1241
      %v1270 = vpack.c.b16 %v1244, %v1243
      %v1271 = vpack.c.b16 %v1246, %v1245
      %v1272 = vpack.c.b16 %v1248, %v1247
      %v1273 = vpack.c.b16 %v1250, %v1249
      %v1274 = vpack.c.b16 %v1252, %v1251
      %v1275 = vpack.c.b16 %v1254, %v1253
      %v1276 = vpack.c.b16 %v1256, %v1255
      %v1277 = vpack.c.b16 %v1258, %v1257
      %v1278 = vpack.c.b16 %v1260, %v1259
      %v1279 = vpack.c.b16 %v1262, %v1261
      %v1280 = vpack.c.b16 %v1264, %v1263
      %1297 = vmatpush.bf16.msra.mxu0 %v1272
      %1298 = vmatpush.bf16.msra.mxu0 %v1271
      %1299 = vmatpush.bf16.msra.mxu0 %v1270
      %1300 = vmatpush.bf16.msra.mxu0 %v1269
      %1301 = vmatpush.bf16.msra.mxu0 %v1268
      %1302 = vmatpush.bf16.msra.mxu0 %v1267
      %1303 = vmatpush.bf16.msra.mxu0 %v1266
      %1304 = vmatpush.bf16.msra.mxu0 %v1265
      %1305 = vmatmul.bf16.gmra.mxu0 %v1163
      %v1306 = vpop.f32.mrf.mxu0
      %v1307 = vadd.f32 %v1199, %v1306
      %v1308 = vpop.f32.mrf.mxu0
      %v1309 = vadd.f32 %v1199, %v1308
      %1310 = vdwg.mxu0
      %1311 = vmatpush.bf16.msra.mxu0 %v1280
      %1312 = vmatpush.bf16.msra.mxu0 %v1279
      %1313 = vmatpush.bf16.msra.mxu0 %v1278
      %1314 = vmatpush.bf16.msra.mxu0 %v1277
      %1315 = vmatpush.bf16.msra.mxu0 %v1276
      %1316 = vmatpush.bf16.msra.mxu0 %v1275
      %1317 = vmatpush.bf16.msra.mxu0 %v1274
      %1318 = vmatpush.bf16.msra.mxu0 %v1273
      %1319 = vmatmul.bf16.gmra.mxu0 %v1164
      %v1320 = vpop.f32.mrf.mxu0
      %v1321 = vadd.f32 %v1307, %v1320
      %v1322 = vpop.f32.mrf.mxu0
      %v1323 = vadd.f32 %v1309, %v1322
      %1324 = vdwg.mxu0
      %1325 = vst [vmem:[#allocation11] sm:$0xff] %v1321
      %1326 = vst [vmem:[#allocation11 + $0x8] sm:$0xff] %v1323
    $region45: #{tpu_custom_call.1} parent=1 // pred_fallthru
      _
    // Predicated region
    $region46: #{tpu_custom_call.1} parent=1 // pred_check
      _
    $region47: #{tpu_custom_call.1} parent=1 // pred_check_branch
      %1328 = sbr.rel (0) target = $region49
    $region48: #{tpu_custom_call.1} parent=1 // pred_region
      %1330 = vsyncadd [#allocation5], 0
      %s1331 = sshll.u32 [#allocation11], 4
      %s1332 = int_to_ptr.vmem [resolvable:$true] %s1331
      %s1333 = sshll.u32 %s5, 4
      %s1334 = int_to_ptr.hbm [resolvable:$true] %s1333
      %1339 = dma.vmem_to_hbm [thread:$0]  %s1332, 256, %s1334, [#allocation5], 128, 128, 8
    $region49: #{tpu_custom_call.1} parent=1 // pred_fallthru
      _
    // Predicated region
    $region50: #{tpu_custom_call.1} parent=1 // pred_check
      _
    $region51: #{tpu_custom_call.1} parent=1 // pred_check_branch
      %1341 = sbr.rel (0) target = $region53
    $region52: #{tpu_custom_call.1} parent=1 // pred_region
      %1343 = dma.done [#allocation5], 256
    $region53: #{tpu_custom_call.1} parent=1 // pred_fallthru
      _
    %1344 = vsyncpa [#allocation4], 1
    %1345 = vsyncpa [#allocation7], 1
    %1346 = vsyncpa [#allocation10], 1
    %1347 = vsyncpa [#allocation5], 1

</llo_original>
